<compile_context>
chip_gen: v7x
topology: tpu7x:2x2x1
jax: 0.10.0
libtpu: 0.0.40
codegen_flags: <defaults>
</compile_context>

<pallas_src>
import functools

import jax
import jax.numpy as jnp
import numpy as np
from jax import lax
from jax.experimental import pallas as pl
from jax.experimental.pallas import tpu as pltpu


def _clustering_loss2_kernel(x_ref, tgt_ref, out_ref, *, n_rows, tau):
    """One grid step processes one (K, T) lane-dense column tile.

    x_ref:   (K, T) logits, rows-on-lanes, K on sublanes.
    tgt_ref: (1, T) int32 target ids; -1 marks a masked-out row.
    out_ref: (1, 1, T) f32 per-core accumulator (revisited across the g axis).
    """
    p = pl.program_id(0)            # parallel (core) axis
    g = pl.program_id(1)            # sequential column-block axis
    n_g = pl.num_programs(1)

    @pl.when(g == 0)
    def _():
        out_ref[...] = jnp.zeros_like(out_ref)

    x = x_ref[...].astype(jnp.float32)          # (K, T)
    k, t = x.shape
    tgt = tgt_ref[...]                          # (1, T) int32

    # log-softmax of (tau * x) along K, evaluated only at the target index:
    #   logp = tau*(x_t - m) - log( sum_k exp(tau*(x_k - m)) )
    m = jnp.max(x, axis=0, keepdims=True)               # (1, T)
    u = (x - m) * tau                                   # (K, T)
    s = jnp.sum(jnp.exp(u), axis=0, keepdims=True)      # (1, T)
    row_iota = lax.broadcasted_iota(jnp.int32, (k, t), 0)
    u_t = jnp.sum(jnp.where(row_iota == tgt, u, 0.0), axis=0, keepdims=True)
    logp = u_t - jnp.log(s)                             # (1, T)

    # Validity: not masked out (sentinel -1) and logical column within range
    # (handles the padded tail block and duplicated clamped blocks).
    col = (p * n_g + g) * t + lax.broadcasted_iota(jnp.int32, (1, t), 1)
    valid = (tgt >= 0) & (col < n_rows)

    out_ref[...] += jnp.where(valid, logp, 0.0)[None]


@functools.partial(jax.jit, static_argnames=("apply_mask", "lane_tile", "num_cores"))
def clustering_loss2(outputs, targets, mask, apply_mask=True,
                     lane_tile=16384, num_cores=2):
    """Pallas implementation of ClusteringLoss2.forward.

    outputs: (b, seq, C, K) float (any float dtype; cast to f32 inside kernel)
    targets: (b, seq, C)    integer cluster ids in [0, K)
    mask:    (b, seq)       0/1
    """
    b, seq, c, k = outputs.shape
    r = b * seq * c

    # Lane-dense presentation for the kernel: (K, R). Single XLA transpose,
    # native dtype (no wrapper-side cast pass).
    x_kr = outputs.reshape(r, k).T                       # (K, R)

    tgt = targets.astype(jnp.int32)
    if apply_mask:
        mbool = mask.reshape(b, seq).astype(bool)
        tgt = jnp.where(mbool[:, :, None], tgt, -1)      # sentinel for masked rows
        denom = jnp.sum(mask.astype(jnp.float32)) * c
    else:
        denom = jnp.float32(r)
    tgt_flat = tgt.reshape(1, r)                         # (1, R) int32

    # Column tile (lanes) per grid step.
    t = r if r <= lane_tile else lane_tile               # t % 128 == 0 or t == r
    n_blocks = -(-r // t)
    n_cores = max(1, int(num_cores))
    blocks_per_core = -(-n_blocks // n_cores)

    def col_block(pi, gi):
        # Logical block index, clamped into range; logically-OOB columns are
        # masked inside the kernel via `col < n_rows`.
        return jnp.minimum(pi * blocks_per_core + gi, n_blocks - 1)

    partial_sums = pl.pallas_call(
        functools.partial(_clustering_loss2_kernel, n_rows=r, tau=0.1),
        out_shape=jax.ShapeDtypeStruct((n_cores, 1, t), jnp.float32),
        grid_spec=pltpu.PrefetchScalarGridSpec(
            num_scalar_prefetch=0,
            grid=(n_cores, blocks_per_core),
            in_specs=[
                pl.BlockSpec((k, t), lambda pi, gi: (0, col_block(pi, gi))),
                pl.BlockSpec((1, t), lambda pi, gi: (0, col_block(pi, gi))),
            ],
            out_specs=pl.BlockSpec((1, 1, t), lambda pi, gi: (pi, 0, 0)),
        ),
        compiler_params=pltpu.CompilerParams(
            dimension_semantics=("parallel", "arbitrary"),
        ),
    )(x_kr, tgt_flat)

    # Final reduction, negate and mean are O(n_cores * t) scalar-ish work.
    return -(jnp.sum(partial_sums) / denom)


def _reference_loss(outputs, targets, mask):
    """Pure-JAX reference mirroring the PyTorch module (float32)."""
    x = outputs.astype(jnp.float32) * 0.1
    p = jax.nn.softmax(x, axis=-1)
    oh = jax.nn.one_hot(targets, x.shape[-1], dtype=jnp.float32)
    res = jnp.sum(p * oh, axis=-1)                       # (b, seq, C)
    m = jnp.broadcast_to(mask[:, :, None].astype(jnp.float32), res.shape)
    return -(jnp.sum(jnp.log(res) * m) / jnp.sum(m))


if __name__ == "__main__":
    b, seq, C, K = 2, 8, 4, 16  # small shapes consistent with the forward pass

    key = jax.random.PRNGKey(0)
    k_out, k_tgt = jax.random.split(key)

    outputs = jax.random.normal(k_out, (b, seq, C, K), dtype=jnp.float32)
    targets = jax.random.randint(k_tgt, (b, seq, C), 0, K, dtype=jnp.int32)
    # deterministic mask: batch 0 keeps first 6 positions, batch 1 keeps first 5
    lengths = jnp.array([6, 5], dtype=jnp.int32)
    mask = (jnp.arange(seq)[None, :] < lengths[:, None]).astype(jnp.float32)

    loss = clustering_loss2(outputs, targets, mask, apply_mask=True)
    jax.block_until_ready(loss)
    ref = _reference_loss(outputs, targets, mask)
    np.testing.assert_allclose(np.asarray(loss), np.asarray(ref), rtol=1e-5, atol=1e-5)

    loss_nm = clustering_loss2(outputs, targets, mask, apply_mask=False)
    jax.block_until_ready(loss_nm)
    ref_nm = _reference_loss(outputs, targets, jnp.ones((b, seq), jnp.float32))
    np.testing.assert_allclose(np.asarray(loss_nm), np.asarray(ref_nm), rtol=1e-5, atol=1e-5)

    print("KERNEL_OK")
</pallas_src>

<mosaic_0001>
module attributes {stable_mosaic.version = 11 : i64} {
  func.func @_clustering_loss2_kernel(%arg0: i32, %arg1: i32, %arg2: memref<16x64xf32, #tpu.memory_space<vmem>>, %arg3: memref<1x64xi32, #tpu.memory_space<vmem>>, %arg4: memref<1x1x64xf32, #tpu.memory_space<vmem>>) attributes {dimension_semantics = [#tpu.dimension_semantics<parallel>, #tpu.dimension_semantics<arbitrary>], iteration_bounds = array<i64: 2, 1>, scalar_prefetch = 0 : i64, scratch_operands = 0 : i64, tpu.core_type = #tpu.core_type<tc>, window_params = [{transform_indices = @transform_0, window_bounds = array<i64: 16, 64>}, {transform_indices = @transform_1, window_bounds = array<i64: 1, 64>}, {transform_indices = @transform_2, window_bounds = array<i64: 1, 1, 64>}]} {
    %c0_i32 = arith.constant 0 : i32
    %0 = arith.cmpi eq, %arg1, %c0_i32 : i32
    %1 = arith.extui %0 : i1 to i32
    %c0_i32_0 = arith.constant 0 : i32
    %2 = arith.cmpi ne, %1, %c0_i32_0 : i32
    scf.if %2 {
      %cst_17 = arith.constant 0.000000e+00 : f32
      %40 = vector.broadcast %cst_17 : f32 to vector<1x1x64xf32>
      %c0_18 = arith.constant 0 : index
      %c0_19 = arith.constant 0 : index
      %c0_20 = arith.constant 0 : index
      %41 = vector.load %arg4[%c0_18, %c0_19, %c0_20] : memref<1x1x64xf32, #tpu.memory_space<vmem>>, vector<1x1x64xf32>
      tpu.vector_store %arg4[%c0_18, %c0_19, %c0_20], %40 {strides = array<i32>} : memref<1x1x64xf32, #tpu.memory_space<vmem>>, vector<1x1x64xf32>,
    } else {
    }
    %c0 = arith.constant 0 : index
    %c0_1 = arith.constant 0 : index
    %3 = vector.load %arg2[%c0, %c0_1] : memref<16x64xf32, #tpu.memory_space<vmem>>, vector<16x64xf32>
    %c0_2 = arith.constant 0 : index
    %c0_3 = arith.constant 0 : index
    %4 = vector.load %arg3[%c0_2, %c0_3] : memref<1x64xi32, #tpu.memory_space<vmem>>, vector<1x64xi32>
    %cst = arith.constant dense<0xFF800000> : vector<64xf32>
    %5 = vector.multi_reduction <maximumf>, %3, %cst [0] : vector<16x64xf32> to vector<64xf32>
    %6 = vector.shape_cast %5 : vector<64xf32> to vector<1x64xf32>
    %7 = vector.broadcast %6 : vector<1x64xf32> to vector<16x64xf32>
    %8 = arith.subf %3, %7 : vector<16x64xf32>
    %cst_4 = arith.constant 1.000000e-01 : f32
    %9 = vector.broadcast %cst_4 : f32 to vector<16x64xf32>
    %10 = arith.mulf %8, %9 : vector<16x64xf32>
    %11 = math.exp %10 : vector<16x64xf32>
    %cst_5 = arith.constant dense<0.000000e+00> : vector<64xf32>
    %12 = vector.multi_reduction <add>, %11, %cst_5 [0] : vector<16x64xf32> to vector<64xf32>
    %13 = vector.shape_cast %12 : vector<64xf32> to vector<1x64xf32>
    %14 = tpu.iota {dimensions = array<i32: 0>} : vector<16x64xi32>
    %15 = vector.broadcast %4 : vector<1x64xi32> to vector<16x64xi32>
    %16 = arith.cmpi eq, %14, %15 : vector<16x64xi32>
    %cst_6 = arith.constant 0.000000e+00 : f32
    %17 = vector.broadcast %cst_6 : f32 to vector<16x64xf32>
    %18 = arith.select %16, %10, %17 : vector<16x64xi1>, vector<16x64xf32>
    %cst_7 = arith.constant dense<0.000000e+00> : vector<64xf32>
    %19 = vector.multi_reduction <add>, %18, %cst_7 [0] : vector<16x64xf32> to vector<64xf32>
    %20 = vector.shape_cast %19 : vector<64xf32> to vector<1x64xf32>
    %21 = math.log %13 : vector<1x64xf32>
    %22 = arith.subf %20, %21 : vector<1x64xf32>
    %c1_i32 = arith.constant 1 : i32
    %23 = arith.muli %arg0, %c1_i32 : i32
    %24 = arith.addi %23, %arg1 : i32
    %c64_i32 = arith.constant 64 : i32
    %25 = arith.muli %24, %c64_i32 : i32
    %26 = tpu.iota {dimensions = array<i32: 1>} : vector<1x64xi32>
    %27 = vector.broadcast %25 : i32 to vector<1x64xi32>
    %28 = arith.addi %27, %26 : vector<1x64xi32>
    %c0_i32_8 = arith.constant 0 : i32
    %29 = vector.broadcast %c0_i32_8 : i32 to vector<1x64xi32>
    %30 = arith.cmpi sge, %4, %29 : vector<1x64xi32>
    %c64_i32_9 = arith.constant 64 : i32
    %31 = vector.broadcast %c64_i32_9 : i32 to vector<1x64xi32>
    %32 = arith.cmpi slt, %28, %31 : vector<1x64xi32>
    %33 = arith.andi %30, %32 : vector<1x64xi1>
    %c0_10 = arith.constant 0 : index
    %c0_11 = arith.constant 0 : index
    %c0_12 = arith.constant 0 : index
    %34 = vector.load %arg4[%c0_10, %c0_11, %c0_12] : memref<1x1x64xf32, #tpu.memory_space<vmem>>, vector<1x1x64xf32>
    %cst_13 = arith.constant 0.000000e+00 : f32
    %35 = vector.broadcast %cst_13 : f32 to vector<1x64xf32>
    %36 = arith.select %33, %22, %35 : vector<1x64xi1>, vector<1x64xf32>
    %37 = vector.shape_cast %36 : vector<1x64xf32> to vector<1x1x64xf32>
    %38 = arith.addf %34, %37 : vector<1x1x64xf32>
    %c0_14 = arith.constant 0 : index
    %c0_15 = arith.constant 0 : index
    %c0_16 = arith.constant 0 : index
    %39 = vector.load %arg4[%c0_14, %c0_15, %c0_16] : memref<1x1x64xf32, #tpu.memory_space<vmem>>, vector<1x1x64xf32>
    tpu.vector_store %arg4[%c0_14, %c0_15, %c0_16], %38 {strides = array<i32>} : memref<1x1x64xf32, #tpu.memory_space<vmem>>, vector<1x1x64xf32>,
    return
  }
  func.func @transform_0(%arg0: i32, %arg1: i32) -> (i32, i32) {
    %c1_i32 = arith.constant 1 : i32
    %0 = arith.muli %arg0, %c1_i32 : i32
    %1 = arith.addi %0, %arg1 : i32
    %c0_i32 = arith.constant 0 : i32
    %2 = arith.minsi %1, %c0_i32 : i32
    %c0_i32_0 = arith.constant 0 : i32
    %c0_i32_1 = arith.constant 0 : i32
    return %c0_i32_0, %2 : i32, i32
  }
  func.func @transform_1(%arg0: i32, %arg1: i32) -> (i32, i32) {
    %c1_i32 = arith.constant 1 : i32
    %0 = arith.muli %arg0, %c1_i32 : i32
    %1 = arith.addi %0, %arg1 : i32
    %c0_i32 = arith.constant 0 : i32
    %2 = arith.minsi %1, %c0_i32 : i32
    %c0_i32_0 = arith.constant 0 : i32
    %c0_i32_1 = arith.constant 0 : i32
    return %c0_i32_0, %2 : i32, i32
  }
  func.func @transform_2(%arg0: i32, %arg1: i32) -> (i32, i32, i32) {
    %c0_i32 = arith.constant 0 : i32
    %c0_i32_0 = arith.constant 0 : i32
    %c0_i32_1 = arith.constant 0 : i32
    return %arg0, %c0_i32, %c0_i32_0 : i32, i32, i32
  }
}

</mosaic_0001>

<llo_original>
// kernel: clustering_loss2.1
$region0: #{clustering_loss2.1}
  #allocation0 [shape = 'u32[]', space=smem, size = 0x4, offset = 0x4, fixed_abs, tag = 'smem constant byte address 0x4 - core index']
  #allocation1 [shape = 'u32[144,128]{1,0:T(1,128)}', space=vmem, size = 0x12000, scoped, tag = 'internal scratch']
  %s0 = inlined_call_operand.vmem [shape: f32[16,64], index: 0, kind: input, shape index: {}]
  %s1 = inlined_call_operand.vmem [shape: s32[1,64], index: 1, kind: input, shape index: {}]
  %s2 = inlined_call_operand.vmem [shape: f32[2,1,64], index: 2, kind: output, shape index: {}]
  %s3 = sld [smem:[#allocation0]]
  $region45: #{clustering_loss2.1} parent=0
    _
  %s5 = ssub.s32 1, %s3
  %s6 = scalar_select 0, %s5, %s3
  loop: start=0, step=1, limit=4
  $region2: #{clustering_loss2.1} parent=0 // loop_pre_header
    _
  $region3: #{clustering_loss2.1} parent=0 // loop_header
    %s8 = sphi 0, %s12
    %p9 = scmp.ge.s32.totalorder %s8, 4
    %s15 = sphi 0, %s27
    %s16 = sphi 0, %s23
    %s17 = sphi 0, %s15
    %s18 = sphi 0, %s16
    %s19 = sphi 0, %s17
    %s20 = sphi 0, %s18
    %s36 = sphi 0, %s38
    %s39 = sphi 0, %s36
    %s40 = sphi 0, %s39
    %s56 = sphi 0, %s40
    %s68 = sphi 0, %s70
    %s71 = sphi 0, %s68
    %s72 = sphi 0, %s71
    %s88 = sphi 0, %s72
    %s94 = sphi 0, %s96
    %s97 = sphi 0, %s94
    %s98 = sphi 0, %s97
    %s114 = sphi 0, %s98
  $region4: #{clustering_loss2.1} parent=0 // loop_header_branch
    %11 = sbr.rel (%p9) target = $region8
  $region5: #{clustering_loss2.1} parent=0 // loop_body
    %s13 = ssub.s32 %s8, 1
    %s14 = ssub.s32 %s8, 2
    %s21 = sadd.s32 1, %s16
    %p22 = scmp.ge.s32.totalorder %s21, 1
    %s23 = scalar_select %p22, 0, %s21
    %s24 = sadd.s32 1, %s15
    %s25 = scalar_select %p22, %s24, %s15
    %p26 = scmp.ge.s32.totalorder %s25, 2
    %s27 = scalar_select %p26, 0, %s25
    %s28 = sadd.s32 %s15, %s16
    %p29 = scmp.lt.s32.totalorder %s28, 0
    %s30 = scalar_select %p29, %s28, 0
    %s31 = sadd.s32 %s27, %s23
    %p32 = scmp.lt.s32.totalorder %s31, 0
    %s33 = scalar_select %p32, %s31, 0
    %s34 = ssub.s32 %s30, %s33
    %p35 = scmp.eq.s32.totalorder %s34, 0
    %s37 = sadd.s32 %s36, 1
    %s38 = scalar_select %p35, %s36, %s37
    %p41 = pneg %p35
    %p42 = scmp.eq.s32.totalorder %s8, 1
    %p43 = por %p41, %p42
    %p44 = scmp.ne.s32.totalorder %s36, %s39
    %p45 = scmp.eq.s32.totalorder %s8, 0
    %p46 = por %p44, %p45
    %p47 = scmp.ne.s32.totalorder %s36, %s39
    %p48 = scmp.eq.s32.totalorder %s13, 1
    %p49 = por %p47, %p48
    %p50 = scmp.ne.s32.totalorder %s39, %s40
    %p51 = scmp.eq.s32.totalorder %s13, 0
    %p52 = por %p50, %p51
    %p53 = scmp.ne.s32.totalorder %s39, %s40
    %p54 = scmp.eq.s32.totalorder %s14, 1
    %p55 = por %p53, %p54
    %p57 = scmp.ne.s32.totalorder %s40, %s56
    %p58 = scmp.eq.s32.totalorder %s14, 0
    %p59 = por %p57, %p58
    %s60 = sadd.s32 %s15, %s16
    %p61 = scmp.lt.s32.totalorder %s60, 0
    %s62 = scalar_select %p61, %s60, 0
    %s63 = sadd.s32 %s27, %s23
    %p64 = scmp.lt.s32.totalorder %s63, 0
    %s65 = scalar_select %p64, %s63, 0
    %s66 = ssub.s32 %s62, %s65
    %p67 = scmp.eq.s32.totalorder %s66, 0
    %s69 = sadd.s32 %s68, 1
    %s70 = scalar_select %p67, %s68, %s69
    %p73 = pneg %p67
    %p74 = scmp.eq.s32.totalorder %s8, 1
    %p75 = por %p73, %p74
    %p76 = scmp.ne.s32.totalorder %s68, %s71
    %p77 = scmp.eq.s32.totalorder %s8, 0
    %p78 = por %p76, %p77
    %p79 = scmp.ne.s32.totalorder %s68, %s71
    %p80 = scmp.eq.s32.totalorder %s13, 1
    %p81 = por %p79, %p80
    %p82 = scmp.ne.s32.totalorder %s71, %s72
    %p83 = scmp.eq.s32.totalorder %s13, 0
    %p84 = por %p82, %p83
    %p85 = scmp.ne.s32.totalorder %s71, %s72
    %p86 = scmp.eq.s32.totalorder %s14, 1
    %p87 = por %p85, %p86
    %p89 = scmp.ne.s32.totalorder %s72, %s88
    %p90 = scmp.eq.s32.totalorder %s14, 0
    %p91 = por %p89, %p90
    %s92 = ssub.s32 %s15, %s27
    %p93 = scmp.eq.s32.totalorder %s92, 0
    %s95 = sadd.s32 %s94, 1
    %s96 = scalar_select %p93, %s94, %s95
    %p99 = pneg %p93
    %p100 = scmp.eq.s32.totalorder %s8, 1
    %p101 = por %p99, %p100
    %p102 = scmp.ne.s32.totalorder %s94, %s97
    %p103 = scmp.eq.s32.totalorder %s8, 0
    %p104 = por %p102, %p103
    %p105 = scmp.ne.s32.totalorder %s94, %s97
    %p106 = scmp.eq.s32.totalorder %s13, 1
    %p107 = por %p105, %p106
    %p108 = scmp.ne.s32.totalorder %s97, %s98
    %p109 = scmp.eq.s32.totalorder %s13, 0
    %p110 = por %p108, %p109
    %p111 = scmp.ne.s32.totalorder %s97, %s98
    %p112 = scmp.eq.s32.totalorder %s14, 1
    %p113 = por %p111, %p112
    %p115 = scmp.ne.s32.totalorder %s98, %s114
    %p116 = scmp.eq.s32.totalorder %s14, 0
    %p117 = por %p115, %p116
    %p118 = scmp.le.s32.totalorder 1, %s8
    %p119 = scmp.lt.s32.totalorder %s8, 3
    %p120 = pnand %p118, %p119
    %p121 = pneg %p120
    // Predicated region
    $region9: #{clustering_loss2.1} parent=5 // pred_check
      _
    $region10: #{clustering_loss2.1} parent=5 // pred_check_branch
      %123 = sbr.rel (%p120) target = $region12
    $region11: #{clustering_loss2.1} parent=5 // pred_region
      %s124 = ssub.s32 %s8, 1
    $region12: #{clustering_loss2.1} parent=5 // pred_fallthru
      _
    %p125 = scmp.lt.s32.totalorder %s8, 2
    // Predicated region
    $region13: #{clustering_loss2.1} parent=5 // pred_check
      %p126 = pneg %p125
    $region14: #{clustering_loss2.1} parent=5 // pred_check_branch
      %128 = sbr.rel (%p126) target = $region16
    $region15: #{clustering_loss2.1} parent=5 // pred_region
      // Predicated region
      $region17: #{clustering_loss2.1} parent=15 // pred_check
        %p129 = pneg %p46
      $region18: #{clustering_loss2.1} parent=15 // pred_check_branch
        %131 = sbr.rel (%p129) target = $region20
      $region19: #{clustering_loss2.1} parent=15 // pred_region
        %s132 = sadd.s32 %s15, %s16
        %p133 = scmp.lt.s32.totalorder %s132, 0
        %s134 = scalar_select %p133, %s132, 0
        %p135 = scmp.lt.s32.totalorder %s134, 0
        %s136 = scalar_select %p135, %s134, 0
        %s137 = smul.addr %s136, 8
        %s138 = scalar_lea.vmem %s0, %s137
        %s139 = sadd.s32 %s15, %s16
        %p140 = scmp.lt.s32.totalorder %s139, 0
        %s141 = scalar_select %p140, %s139, 0
      $region20: #{clustering_loss2.1} parent=15 // pred_fallthru
        _
      // Predicated region
      $region21: #{clustering_loss2.1} parent=15 // pred_check
        %p142 = pneg %p78
      $region22: #{clustering_loss2.1} parent=15 // pred_check_branch
        %144 = sbr.rel (%p142) target = $region24
      $region23: #{clustering_loss2.1} parent=15 // pred_region
        %s145 = sadd.s32 %s15, %s16
        %p146 = scmp.lt.s32.totalorder %s145, 0
        %s147 = scalar_select %p146, %s145, 0
        %p148 = scmp.lt.s32.totalorder %s147, 0
        %s149 = scalar_select %p148, %s147, 0
        %s150 = scalar_lea.vmem %s1, %s149
        %s151 = sadd.s32 %s15, %s16
        %p152 = scmp.lt.s32.totalorder %s151, 0
        %s153 = scalar_select %p152, %s151, 0
      $region24: #{clustering_loss2.1} parent=15 // pred_fallthru
        _
    $region16: #{clustering_loss2.1} parent=5 // pred_fallthru
      _
    %p154 = scmp.le.s32.totalorder 1, %s8
    %p155 = scmp.lt.s32.totalorder %s8, 3
    %p156 = pnand %p154, %p155
    %p157 = pneg %p156
    // Predicated region
    $region25: #{clustering_loss2.1} parent=5 // pred_check
      _
    $region26: #{clustering_loss2.1} parent=5 // pred_check_branch
      %159 = sbr.rel (%p156) target = $region28
    $region27: #{clustering_loss2.1} parent=5 // pred_region
      %s160 = ssub.s32 %s8, 1
      %s161 = sadd.s32 %s17, %s18
      %p162 = scmp.lt.s32.totalorder %s161, 0
      %s163 = scalar_select %p162, %s161, 0
      %p164 = scmp.lt.s32.totalorder %s163, 0
      %s165 = scalar_select %p164, %s163, 0
      %s166 = smul.addr %s165, 8
      %s167 = scalar_lea.vmem %s0, %s166
      %p168 = pneg %p52
      %p169 = pneg %p49
      %s170 = sadd.s32 %s17, %s18
      %p171 = scmp.lt.s32.totalorder %s170, 0
      %s172 = scalar_select %p171, %s170, 0
      %p173 = scmp.lt.s32.totalorder %s172, 0
      %s174 = scalar_select %p173, %s172, 0
      %s175 = scalar_lea.vmem %s1, %s174
      %p176 = pneg %p84
      %p177 = pneg %p81
      %p178 = pneg %p110
      %p179 = pneg %p107
      %p180 = scmp.lt.s32.totalorder %s17, 1
      %s181 = scalar_select %p180, %s17, 1
      %s182 = scalar_lea.vmem %s2, %s181
      %s183 = sadd.s32 %s17, %s18
      %p184 = scmp.lt.s32.totalorder %s183, 0
      %s185 = scalar_select %p184, %s183, 0
      %p186 = scmp.lt.s32.totalorder %s185, 0
      %s187 = scalar_select %p186, %s185, 0
      %s188 = smul.addr %s187, 8
      %s189 = scalar_lea.vmem %s0, %s188
      %s190 = sadd.s32 %s17, %s18
      %p191 = scmp.lt.s32.totalorder %s190, 0
      %s192 = scalar_select %p191, %s190, 0
      %s193 = sadd.s32 %s17, %s18
      %p194 = scmp.lt.s32.totalorder %s193, 0
      %s195 = scalar_select %p194, %s193, 0
      %p196 = scmp.lt.s32.totalorder %s195, 0
      %s197 = scalar_select %p196, %s195, 0
      %s198 = scalar_lea.vmem %s1, %s197
      %s199 = sadd.s32 %s17, %s18
      %p200 = scmp.lt.s32.totalorder %s199, 0
      %s201 = scalar_select %p200, %s199, 0
      %p202 = scmp.lt.s32.totalorder %s17, 1
      %s203 = scalar_select %p202, %s17, 1
      %s204 = scalar_lea.vmem %s2, %s203
      %p205 = scmp.eq.s32.totalorder %s18, 0
      // Predicated region
      $region29: #{clustering_loss2.1} parent=27 // pred_check
        %p206 = pneg %p205
      $region30: #{clustering_loss2.1} parent=27 // pred_check_branch
        %208 = sbr.rel (%p206) target = $region32
      $region31: #{clustering_loss2.1} parent=27 // pred_region
        %vm209 = vcmask 516096
        %210 = vst.msk [vmem:[%s204] sm:$0x1] %vm209, 0.0
      $region32: #{clustering_loss2.1} parent=27 // pred_fallthru
        _
      %v211 = vld [vmem:[%s189] sm:$0xff]
      %v212 = vld [vmem:[%s189 + $0x8] sm:$0xff]
      %v213 = vld [vmem:[%s198] sm:$0x1]
      %vm214 = vcmask 523264
      %v215 = vsel %vm214, %v211, -inf
      %v216 = vsel %vm214, %v212, -inf
      %v217 = vmax.f32 %v215, %v216
      %v218 = vrot.slane %v217, 4
      %v219 = vmax.f32 %v217, %v218
      %v220 = vrot.slane %v219, 2
      %v221 = vmax.f32 %v219, %v220
      %v222 = vrot.slane %v221, 1
      %v223 = vmax.f32 %v221, %v222
      %v224 = vsub.f32 %v211, %v223
      %v225 = vsub.f32 %v212, %v223
      %v226 = vmul.f32 %v224, 0.1
      %v227 = vmul.f32 %v225, 0.1
      %v228 = vmul.f32 %v226, 1.442695
      %v229 = vpow.pop %v228
      %v230 = vmul.f32 %v227, 1.442695
      %v231 = vpow.pop %v230
      %v232 = vsel %vm214, %v229, 0.0
      %v233 = vsel %vm214, %v231, 0.0
      %v234 = vadd.f32 %v232, %v233
      %v235 = vrot.slane %v234, 4
      %v236 = vadd.f32 %v234, %v235
      %v237 = vrot.slane %v236, 2
      %v238 = vadd.f32 %v236, %v237
      %v239 = vrot.slane %v238, 1
      %v240 = vadd.f32 %v238, %v239
      %v241 = vlaneseq
      %v242 = vshrl.u32 %v241, 7
      %v243 = vadd.s32 %v242, 8
      %v244 = vlaneseq
      %v245 = vshrl.u32 %v244, 7
      %v246 = vsub.s32 0, %v245
      %v247 = vrot.slane %v213, %v246
      %vm248 = vcmp.eq.s32.totalorder %v242, %v247
      %vm249 = vcmp.eq.s32.totalorder %v243, %v247
      %v250 = vsel %vm248, %v226, 0.0
      %v251 = vsel %vm249, %v227, 0.0
      %v252 = vsel %vm214, %v250, 0.0
      %v253 = vsel %vm214, %v251, 0.0
      %v254 = vadd.f32 %v252, %v253
      %v255 = vrot.slane %v254, 4
      %v256 = vadd.f32 %v254, %v255
      %v257 = vrot.slane %v256, 2
      %v258 = vadd.f32 %v256, %v257
      %v259 = vrot.slane %v258, 1
      %v260 = vadd.f32 %v258, %v259
      %v261 = vlog2.pop %v240
      %v262 = vmul.f32 %v261, 0.6931472
      %v263 = vsub.f32 %v260, %v262
      %s264 = sadd.s32 %s17, %s18
      %s265 = smul.u32 %s264, 64
      %v266 = vlaneseq
      %v267 = vand.u32 %v266, 127
      %v268 = vstv %s265
      %v269 = vadd.s32 %v268, %v267
      %vm270 = vcmp.ge.s32.totalorder %v213, 0
      %vm271 = vcmp.lt.s32.totalorder %v269, 64
      %vm272 = vmand %vm270, %vm271
      %v273 = vld [vmem:[%s204] sm:$0x1]
      %v274 = vsel %vm272, %v263, 0.0
      %v275 = vadd.f32 %v273, %v274
      %vm276 = vcmask 516096
      %277 = vst.msk [vmem:[%s204] sm:$0x1] %vm276, %v275
      %p278 = scmp.lt.s32.totalorder %s17, 1
      %s279 = scalar_select %p278, %s17, 1
      %s280 = scalar_lea.vmem %s2, %s279
      // Predicated region
      $region33: #{clustering_loss2.1} parent=27 // pred_check
        %p281 = pneg %p107
      $region34: #{clustering_loss2.1} parent=27 // pred_check_branch
        %283 = sbr.rel (%p281) target = $region36
      $region35: #{clustering_loss2.1} parent=27 // pred_region
        _
      $region36: #{clustering_loss2.1} parent=27 // pred_fallthru
        _
    $region28: #{clustering_loss2.1} parent=5 // pred_fallthru
      _
    %p284 = scmp.le.s32.totalorder 2, %s8
    // Predicated region
    $region37: #{clustering_loss2.1} parent=5 // pred_check
      %p285 = pneg %p284
    $region38: #{clustering_loss2.1} parent=5 // pred_check_branch
      %287 = sbr.rel (%p285) target = $region40
    $region39: #{clustering_loss2.1} parent=5 // pred_region
      %s288 = ssub.s32 %s8, 2
      // Predicated region
      $region41: #{clustering_loss2.1} parent=39 // pred_check
        %p289 = pneg %p113
      $region42: #{clustering_loss2.1} parent=39 // pred_check_branch
        %291 = sbr.rel (%p289) target = $region44
      $region43: #{clustering_loss2.1} parent=39 // pred_region
        %p292 = scmp.lt.s32.totalorder %s19, 1
        %s293 = scalar_select %p292, %s19, 1
        %s294 = scalar_lea.vmem %s2, %s293
      $region44: #{clustering_loss2.1} parent=39 // pred_fallthru
        _
    $region40: #{clustering_loss2.1} parent=5 // pred_fallthru
      _
  $region6: #{clustering_loss2.1} parent=0 // loop_footer
    %s12 = sadd.s32 1, %s8
  $region7: #{clustering_loss2.1} parent=0 // loop_footer_branch
    %7 = sbr.rel target = $region3
  $region8: #{clustering_loss2.1} parent=0 // loop_exit
    _

</llo_original>
